<compile_context>
chip_gen: v6e
topology: v6e:2x2x1
jax: 0.10.0
libtpu: 0.0.40
codegen_flags: <defaults>
</compile_context>

<pallas_src>
import functools
import math

import jax
import jax.numpy as jnp
from jax.experimental import pallas as pl
from jax.experimental.pallas import tpu as pltpu


def _round_up(n, m):
    return ((n + m - 1) // m) * m


def _pinn_mlp_kernel(layer_kinds, x_ref, *refs):
    """Fused MLP forward in transposed ([width, batch_tile]) layout.

    refs = (w1, b1, w2, b2, ..., wL, bL, out_ref).
      * kind == "tiny_k":  w is [out_i, in_i] (in_i <= 8), VPU outer-product FMAs
      * kind == "vec_out": w is [in_i, 1],  multiply + sublane reduce
      * kind == "matmul":  w is [out_i, in_i], MXU matmul
    biases are [out_i, 1] (broadcast along the lane/batch axis).
    """
    out_ref = refs[-1]
    n_layers = len(layer_kinds)
    h = x_ref[...].astype(jnp.float32)            # [in_dim, bt]
    for i, kind in enumerate(layer_kinds):
        w = refs[2 * i][...]
        b = refs[2 * i + 1][...]
        last = i == n_layers - 1
        if kind == "tiny_k":
            # Tiny-K layer (e.g. in_dim=2): a K=2 MXU pass is >98% zeros, so
            # do it as a couple of broadcast FMAs on the VPU instead.
            k_dim = w.shape[1]
            acc = w[:, 0:1] * h[0:1, :] + b       # [out_i, bt]
            for kk in range(1, k_dim):
                acc = acc + w[:, kk:kk + 1] * h[kk:kk + 1, :]
            h = acc
        elif kind == "vec_out":
            # N=1 output layer: VPU multiply + XLU sublane reduction instead
            # of a 1-row MXU pass.  w is pre-transposed to [in_i, 1].
            h = jnp.sum(w * h, axis=0, keepdims=True) + b     # [1, bt]
        else:
            # Real matmul work (32x32 hidden layers) -> MXU, f32 accumulate.
            h = jnp.dot(w, h, preferred_element_type=jnp.float32) + b
        if not last:
            # TODO(synk): if a bundle dump shows tanh lowering to a VALU
            # polynomial chain (not the EUP), rewrite as 2*sigmoid(2x)-1 via
            # jnp.exp + pl.reciprocal(approx=True) and re-validate tolerance.
            h = jnp.tanh(h)
    out_ref[...] = h.astype(out_ref.dtype)        # lane-dense [out_dim, bt] store


def pinn_forward(x, weights, biases, *, batch_tile=1024):
    """Run the PINN MLP forward pass with a single fused Pallas kernel.

    x:       [batch, layers[0]]  float32
    weights: list of W_i with PyTorch shape [layers[i+1], layers[i]]
    biases:  list of b_i with shape [layers[i+1]]
    Returns  [batch, layers[-1]] float32.
    """
    n_layers = len(weights)
    batch, in_dim = x.shape
    out_dim = int(weights[-1].shape[0])

    x = jnp.asarray(x, jnp.float32)

    # --- batch tiling on the lane axis --------------------------------------
    bt = _round_up(min(batch_tile, _round_up(batch, 128)), 128)
    padded_batch = _round_up(batch, bt)
    num_steps = padded_batch // bt
    # v7x: even step count so the "parallel" axis splits evenly across both
    # TensorCores; the one extra tile of throwaway padding compute is
    # negligible (and harmless on single-TC v5e/v6e).
    if num_steps > 1 and num_steps % 2 == 1:
        num_steps += 1
        padded_batch = num_steps * bt

    # Transposed, zero-padded input: [in_dim, padded_batch] (batch lane-dense).
    x_t = jnp.pad(x.T, ((0, 0), (0, padded_batch - batch)))

    # --- parameters: pick per-layer compute path, keep weights VMEM-resident
    params = []
    layer_kinds = []
    for i, (w, b) in enumerate(zip(weights, biases)):
        w = jnp.asarray(w, jnp.float32)           # [out_i, in_i] (PyTorch layout)
        b = jnp.asarray(b, jnp.float32)
        out_i, in_i = w.shape
        last = i == n_layers - 1
        if in_i <= 8:
            layer_kinds.append("tiny_k")
            params.append(w)                      # [out_i, in_i]
        elif last and out_i == 1:
            layer_kinds.append("vec_out")
            params.append(w.T)                    # [in_i, 1]
        else:
            layer_kinds.append("matmul")
            params.append(w)                      # [out_i, in_i]
        params.append(b[:, None])                 # [out_i, 1]

    grid = (num_steps,)

    # x / out: tiled over batch (lane axis).  Params: full arrays, same block
    # every step (constant index_map -> stay VMEM-resident, no re-DMA).
    in_specs = [pl.BlockSpec((in_dim, bt), lambda i: (0, i))]
    for p in params:
        in_specs.append(pl.BlockSpec(p.shape, lambda i: (0, 0)))
    out_spec = pl.BlockSpec((out_dim, bt), lambda i: (0, i))

    kernel = functools.partial(_pinn_mlp_kernel, tuple(layer_kinds))

    # Advisory cost estimate for XLA scheduling around the custom call.
    flops = 2 * padded_batch * sum(
        int(w.shape[0]) * int(w.shape[1]) for w in weights)
    transcendentals = padded_batch * sum(
        int(w.shape[0]) for w in weights[:-1])    # tanh on hidden widths
    bytes_accessed = 4 * (batch * in_dim + batch * out_dim
                          + sum(int(p.size) for p in params))

    out = pl.pallas_call(
        kernel,
        out_shape=jax.ShapeDtypeStruct((out_dim, padded_batch), jnp.float32),
        grid_spec=pltpu.PrefetchScalarGridSpec(
            num_scalar_prefetch=0,
            grid=grid,
            in_specs=in_specs,
            out_specs=out_spec,
        ),
        compiler_params=pltpu.CompilerParams(
            dimension_semantics=("parallel",),
            vmem_limit_bytes=32 * 1024 * 1024,
        ),
        cost_estimate=pl.CostEstimate(
            flops=flops,
            transcendentals=transcendentals,
            bytes_accessed=bytes_accessed,
        ),
    )(x_t, *params)

    # Lane-dense [out_dim, padded_batch] back to PyTorch's [batch, out_dim].
    return out[:, :batch].T


def init_pinn_params(layers, key):
    """Deterministic init matching nn.Linear conventions (uniform +-1/sqrt(fan_in))."""
    weights, biases = [], []
    for i in range(len(layers) - 1):
        fan_in, fan_out = layers[i], layers[i + 1]
        key, kw, kb = jax.random.split(key, 3)
        bound = 1.0 / math.sqrt(fan_in)
        weights.append(jax.random.uniform(
            kw, (fan_out, fan_in), jnp.float32, -bound, bound))
        biases.append(jax.random.uniform(
            kb, (fan_out,), jnp.float32, -bound, bound))
    return weights, biases


def pinn_forward_ref(x, weights, biases):
    """Pure-JAX reference of the same MLP (Linear/Tanh stack)."""
    h = x
    for i, (w, b) in enumerate(zip(weights, biases)):
        h = h @ w.T + b
        if i < len(weights) - 1:
            h = jnp.tanh(h)
    return h


if __name__ == "__main__":
    # Small PINN: input dim 2 (e.g. (x, t)), two hidden layers of 32, scalar u.
    layers = [2, 32, 32, 1]
    batch = 16

    key = jax.random.PRNGKey(0)
    key, kx = jax.random.split(key)
    x = jax.random.uniform(kx, (batch, layers[0]), jnp.float32)

    weights, biases = init_pinn_params(layers, key)

    out = jax.block_until_ready(pinn_forward(x, weights, biases))
    ref = pinn_forward_ref(x, weights, biases)
    assert out.shape == (batch, layers[-1])
    assert jnp.allclose(out, ref, atol=1e-5, rtol=1e-5), "mismatch vs reference"

    # Non-tile-aligned batch (padding path).
    key, k2 = jax.random.split(key)
    x2 = jax.random.uniform(k2, (batch + 3, layers[0]), jnp.float32)
    out2 = jax.block_until_ready(pinn_forward(x2, weights, biases))
    ref2 = pinn_forward_ref(x2, weights, biases)
    assert out2.shape == (batch + 3, layers[-1])
    assert jnp.allclose(out2, ref2, atol=1e-5, rtol=1e-5), "mismatch (padded)"

    # Multi-step grid (odd->even step rounding path), small tile to force it.
    key, k3 = jax.random.split(key)
    x3 = jax.random.uniform(k3, (300, layers[0]), jnp.float32)
    out3 = jax.block_until_ready(pinn_forward(x3, weights, biases, batch_tile=128))
    ref3 = pinn_forward_ref(x3, weights, biases)
    assert out3.shape == (300, layers[-1])
    assert jnp.allclose(out3, ref3, atol=1e-5, rtol=1e-5), "mismatch (multi-step)"

    # TODO(synk): compute_residual / loss / train_model are abstract training
    # utilities (autodiff + optimizer loop) and are out of scope for a forward
    # kernel.
    print("KERNEL_OK")
</pallas_src>

<mosaic_0001>
module attributes {stable_mosaic.version = 11 : i64} {
  func.func @_pinn_mlp_kernel(%arg0: i32, %arg1: memref<2x128xf32, #tpu.memory_space<vmem>>, %arg2: memref<32x2xf32, #tpu.memory_space<vmem>>, %arg3: memref<32x1xf32, #tpu.memory_space<vmem>>, %arg4: memref<32x32xf32, #tpu.memory_space<vmem>>, %arg5: memref<32x1xf32, #tpu.memory_space<vmem>>, %arg6: memref<32x1xf32, #tpu.memory_space<vmem>>, %arg7: memref<1x1xf32, #tpu.memory_space<vmem>>, %arg8: memref<1x128xf32, #tpu.memory_space<vmem>>) attributes {dimension_semantics = [#tpu.dimension_semantics<parallel>], iteration_bounds = array<i64: 1>, scalar_prefetch = 0 : i64, scratch_operands = 0 : i64, tpu.core_type = #tpu.core_type<tc>, window_params = [{transform_indices = @transform_0, window_bounds = array<i64: 2, 128>}, {pipeline_mode = #tpu.pipeline_mode<synchronous>, transform_indices = @transform_1, window_bounds = array<i64: 32, 2>}, {pipeline_mode = #tpu.pipeline_mode<synchronous>, transform_indices = @transform_2, window_bounds = array<i64: 32, 1>}, {pipeline_mode = #tpu.pipeline_mode<synchronous>, transform_indices = @transform_3, window_bounds = array<i64: 32, 32>}, {pipeline_mode = #tpu.pipeline_mode<synchronous>, transform_indices = @transform_4, window_bounds = array<i64: 32, 1>}, {pipeline_mode = #tpu.pipeline_mode<synchronous>, transform_indices = @transform_5, window_bounds = array<i64: 32, 1>}, {pipeline_mode = #tpu.pipeline_mode<synchronous>, transform_indices = @transform_6, window_bounds = array<i64: 1, 1>}, {transform_indices = @transform_7, window_bounds = array<i64: 1, 128>}]} {
    %c0 = arith.constant 0 : index
    %c0_0 = arith.constant 0 : index
    %0 = vector.load %arg1[%c0, %c0_0] : memref<2x128xf32, #tpu.memory_space<vmem>>, vector<2x128xf32>
    %c0_1 = arith.constant 0 : index
    %c0_2 = arith.constant 0 : index
    %1 = vector.load %arg2[%c0_1, %c0_2] : memref<32x2xf32, #tpu.memory_space<vmem>>, vector<32x2xf32>
    %c0_3 = arith.constant 0 : index
    %c0_4 = arith.constant 0 : index
    %2 = vector.load %arg3[%c0_3, %c0_4] : memref<32x1xf32, #tpu.memory_space<vmem>>, vector<32x1xf32>
    %3 = vector.extract_strided_slice %1 {offsets = [0, 0], sizes = [32, 1], strides = [1, 1]} : vector<32x2xf32> to vector<32x1xf32>
    %4 = vector.extract_strided_slice %0 {offsets = [0, 0], sizes = [1, 128], strides = [1, 1]} : vector<2x128xf32> to vector<1x128xf32>
    %5 = vector.broadcast %3 : vector<32x1xf32> to vector<32x128xf32>
    %6 = vector.broadcast %4 : vector<1x128xf32> to vector<32x128xf32>
    %7 = arith.mulf %5, %6 : vector<32x128xf32>
    %8 = vector.broadcast %2 : vector<32x1xf32> to vector<32x128xf32>
    %9 = arith.addf %7, %8 : vector<32x128xf32>
    %10 = vector.extract_strided_slice %1 {offsets = [0, 1], sizes = [32, 1], strides = [1, 1]} : vector<32x2xf32> to vector<32x1xf32>
    %11 = vector.extract_strided_slice %0 {offsets = [1, 0], sizes = [1, 128], strides = [1, 1]} : vector<2x128xf32> to vector<1x128xf32>
    %12 = vector.broadcast %10 : vector<32x1xf32> to vector<32x128xf32>
    %13 = vector.broadcast %11 : vector<1x128xf32> to vector<32x128xf32>
    %14 = arith.mulf %12, %13 : vector<32x128xf32>
    %15 = arith.addf %9, %14 : vector<32x128xf32>
    %16 = math.tanh %15 : vector<32x128xf32>
    %c0_5 = arith.constant 0 : index
    %c0_6 = arith.constant 0 : index
    %17 = vector.load %arg4[%c0_5, %c0_6] : memref<32x32xf32, #tpu.memory_space<vmem>>, vector<32x32xf32>
    %c0_7 = arith.constant 0 : index
    %c0_8 = arith.constant 0 : index
    %18 = vector.load %arg5[%c0_7, %c0_8] : memref<32x1xf32, #tpu.memory_space<vmem>>, vector<32x1xf32>
    %cst = arith.constant dense<0.000000e+00> : vector<32x128xf32>
    %19 = tpu.matmul %17, %16, %cst {dimension_numbers = #tpu.dot_dimension_numbers<[1], [0], [0], [1], [0, 0, 1, 1], [], []>} : vector<32x32xf32>, vector<32x128xf32>, vector<32x128xf32> -> vector<32x128xf32>
    %20 = vector.broadcast %18 : vector<32x1xf32> to vector<32x128xf32>
    %21 = arith.addf %19, %20 : vector<32x128xf32>
    %22 = math.tanh %21 : vector<32x128xf32>
    %c0_9 = arith.constant 0 : index
    %c0_10 = arith.constant 0 : index
    %23 = vector.load %arg6[%c0_9, %c0_10] : memref<32x1xf32, #tpu.memory_space<vmem>>, vector<32x1xf32>
    %c0_11 = arith.constant 0 : index
    %c0_12 = arith.constant 0 : index
    %24 = vector.load %arg7[%c0_11, %c0_12] : memref<1x1xf32, #tpu.memory_space<vmem>>, vector<1x1xf32>
    %25 = vector.broadcast %23 : vector<32x1xf32> to vector<32x128xf32>
    %26 = arith.mulf %25, %22 : vector<32x128xf32>
    %cst_13 = arith.constant dense<0.000000e+00> : vector<128xf32>
    %27 = vector.multi_reduction <add>, %26, %cst_13 [0] : vector<32x128xf32> to vector<128xf32>
    %28 = vector.shape_cast %27 : vector<128xf32> to vector<1x128xf32>
    %29 = vector.broadcast %24 : vector<1x1xf32> to vector<1x128xf32>
    %30 = arith.addf %28, %29 : vector<1x128xf32>
    %c0_14 = arith.constant 0 : index
    %c0_15 = arith.constant 0 : index
    %31 = vector.load %arg8[%c0_14, %c0_15] : memref<1x128xf32, #tpu.memory_space<vmem>>, vector<1x128xf32>
    tpu.vector_store %arg8[%c0_14, %c0_15], %30 {strides = array<i32>} : memref<1x128xf32, #tpu.memory_space<vmem>>, vector<1x128xf32>,
    return
  }
  func.func @transform_0(%arg0: i32) -> (i32, i32) {
    %c0_i32 = arith.constant 0 : i32
    %c0_i32_0 = arith.constant 0 : i32
    return %c0_i32, %arg0 : i32, i32
  }
  func.func @transform_1(%arg0: i32) -> (i32, i32) {
    %c0_i32 = arith.constant 0 : i32
    %c0_i32_0 = arith.constant 0 : i32
    %c0_i32_1 = arith.constant 0 : i32
    return %c0_i32, %c0_i32_0 : i32, i32
  }
  func.func @transform_2(%arg0: i32) -> (i32, i32) {
    %c0_i32 = arith.constant 0 : i32
    %c0_i32_0 = arith.constant 0 : i32
    %c0_i32_1 = arith.constant 0 : i32
    return %c0_i32, %c0_i32_0 : i32, i32
  }
  func.func @transform_3(%arg0: i32) -> (i32, i32) {
    %c0_i32 = arith.constant 0 : i32
    %c0_i32_0 = arith.constant 0 : i32
    %c0_i32_1 = arith.constant 0 : i32
    return %c0_i32, %c0_i32_0 : i32, i32
  }
  func.func @transform_4(%arg0: i32) -> (i32, i32) {
    %c0_i32 = arith.constant 0 : i32
    %c0_i32_0 = arith.constant 0 : i32
    %c0_i32_1 = arith.constant 0 : i32
    return %c0_i32, %c0_i32_0 : i32, i32
  }
  func.func @transform_5(%arg0: i32) -> (i32, i32) {
    %c0_i32 = arith.constant 0 : i32
    %c0_i32_0 = arith.constant 0 : i32
    %c0_i32_1 = arith.constant 0 : i32
    return %c0_i32, %c0_i32_0 : i32, i32
  }
  func.func @transform_6(%arg0: i32) -> (i32, i32) {
    %c0_i32 = arith.constant 0 : i32
    %c0_i32_0 = arith.constant 0 : i32
    %c0_i32_1 = arith.constant 0 : i32
    return %c0_i32, %c0_i32_0 : i32, i32
  }
  func.func @transform_7(%arg0: i32) -> (i32, i32) {
    %c0_i32 = arith.constant 0 : i32
    %c0_i32_0 = arith.constant 0 : i32
    return %c0_i32, %arg0 : i32, i32
  }
}

</mosaic_0001>

<llo_original>
// kernel: tpu_custom_call.1
$region0: #{tpu_custom_call.1}
  #allocation0 [shape = 'u32[]', space=smem, size = 0x4, offset = 0x4, fixed_abs, tag = 'smem constant byte address 0x4 - core index']
  #allocation1 [shape = 'u32[144,128]{1,0:T(1,128)}', space=vmem, size = 0x12000, scoped, tag = 'internal scratch']
  #allocation2 [shape = 'f32[1,1]{1,0:T(1,128)S(1)}', space=vmem, size = 0x200, scoped, tag = 'scoped memory for tpu_custom_call.1']
  %s0 = inlined_call_operand.vmem [shape: f32[2,128], index: 0, kind: input, shape index: {}]
  %s1 = inlined_call_operand.vmem [shape: f32[32,2], index: 1, kind: input, shape index: {}]
  %s2 = inlined_call_operand.vmem [shape: f32[32,1], index: 2, kind: input, shape index: {}]
  %s3 = inlined_call_operand.vmem [shape: f32[32,32], index: 3, kind: input, shape index: {}]
  %s4 = inlined_call_operand.vmem [shape: f32[32,1], index: 4, kind: input, shape index: {}]
  %s5 = inlined_call_operand.vmem [shape: f32[32,1], index: 5, kind: input, shape index: {}]
  %s6 = inlined_call_operand.<no memory space> [shape: f32[1,1], index: 6, kind: input, shape index: {}]
  %s7 = inlined_call_operand.hbm [shape: f32[1,128], index: 7, kind: output, shape index: {}]
  %s8 = sld [smem:[#allocation0]]
  $region38: #{tpu_custom_call.1} parent=0
    _
  %s10 = ssub.s32 1, %s8
  %s11 = scalar_select 0, %s10, %s8
  %v12 = vstv %s6
  %13 = vst [vmem:[#allocation2] sm:$0x1] %v12
  $region1: #{tpu_custom_call.1} parent=0
    #allocation3 [shape = 'u8[512]{0}', space=vmem, size = 0x400, scoped, tag = 'output window, operand 0, single buffered']
    #allocation4 [shape = 's32[1]{0}', space=sflag, size = 0x4, scoped, tag = 'scoped memory for tpu_custom_call.1']
    %14 = vsyncpa [#allocation4], 0
    // Predicated region
    $region2: #{tpu_custom_call.1} parent=1 // pred_check
      _
    $region3: #{tpu_custom_call.1} parent=1 // pred_check_branch
      %16 = sbr.rel (0) target = $region5
    $region4: #{tpu_custom_call.1} parent=1 // pred_region
      _
    $region5: #{tpu_custom_call.1} parent=1 // pred_fallthru
      _
    // Predicated region
    $region6: #{tpu_custom_call.1} parent=1 // pred_check
      _
    $region7: #{tpu_custom_call.1} parent=1 // pred_check_branch
      %18 = sbr.rel (0) target = $region9
    $region8: #{tpu_custom_call.1} parent=1 // pred_region
      _
    $region9: #{tpu_custom_call.1} parent=1 // pred_fallthru
      _
    // Predicated region
    $region10: #{tpu_custom_call.1} parent=1 // pred_check
      _
    $region11: #{tpu_custom_call.1} parent=1 // pred_check_branch
      %20 = sbr.rel (0) target = $region13
    $region12: #{tpu_custom_call.1} parent=1 // pred_region
      _
    $region13: #{tpu_custom_call.1} parent=1 // pred_fallthru
      _
    // Predicated region
    $region14: #{tpu_custom_call.1} parent=1 // pred_check
      _
    $region15: #{tpu_custom_call.1} parent=1 // pred_check_branch
      %22 = sbr.rel (0) target = $region17
    $region16: #{tpu_custom_call.1} parent=1 // pred_region
      _
    $region17: #{tpu_custom_call.1} parent=1 // pred_fallthru
      _
    // Predicated region
    $region18: #{tpu_custom_call.1} parent=1 // pred_check
      _
    $region19: #{tpu_custom_call.1} parent=1 // pred_check_branch
      %24 = sbr.rel (0) target = $region21
    $region20: #{tpu_custom_call.1} parent=1 // pred_region
      _
    $region21: #{tpu_custom_call.1} parent=1 // pred_fallthru
      _
    // Predicated region
    $region22: #{tpu_custom_call.1} parent=1 // pred_check
      _
    $region23: #{tpu_custom_call.1} parent=1 // pred_check_branch
      %26 = sbr.rel (0) target = $region25
    $region24: #{tpu_custom_call.1} parent=1 // pred_region
      _
    $region25: #{tpu_custom_call.1} parent=1 // pred_fallthru
      _
    // Predicated region
    $region26: #{tpu_custom_call.1} parent=1 // pred_check
      _
    $region27: #{tpu_custom_call.1} parent=1 // pred_check_branch
      %28 = sbr.rel (0) target = $region29
    $region28: #{tpu_custom_call.1} parent=1 // pred_region
      _
    $region29: #{tpu_custom_call.1} parent=1 // pred_fallthru
      _
    %v29 = vld [vmem:[%s0] sm:$0x3]
    %v30 = vld [vmem:[%s1] sm:$0xff]
    %v31 = vld [vmem:[%s1 + $0x8] sm:$0xff]
    %v32 = vld [vmem:[%s1 + $0x10] sm:$0xff]
    %v33 = vld [vmem:[%s1 + $0x18] sm:$0xff]
    %v34 = vld [vmem:[%s2] sm:$0xff]
    %v35 = vld [vmem:[%s2 + $0x8] sm:$0xff]
    %v36 = vld [vmem:[%s2 + $0x10] sm:$0xff]
    %v37 = vld [vmem:[%s2 + $0x18] sm:$0xff]
    %39 = vset.pattern.permute.xlu0 0
    %40 = vperm.xlu0 %39, %v30
    %v41 = vpop.permute.xlu0 %40
    %44 = vset.pattern.permute.xlu0 0
    %45 = vperm.xlu0 %44, %v31
    %v46 = vpop.permute.xlu0 %45
    %49 = vset.pattern.permute.xlu0 0
    %50 = vperm.xlu0 %49, %v32
    %v51 = vpop.permute.xlu0 %50
    %54 = vset.pattern.permute.xlu0 0
    %55 = vperm.xlu0 %54, %v33
    %v56 = vpop.permute.xlu0 %55
    %v58 = vlaneseq
    %v59 = vshrl.u32 %v58, 7
    %v60 = vsub.s32 0, %v59
    %v61 = vrot.slane %v29, %v60
    %v62 = vmul.f32 %v41, %v61
    %v63 = vmul.f32 %v46, %v61
    %v64 = vmul.f32 %v51, %v61
    %v65 = vmul.f32 %v56, %v61
    %67 = vset.pattern.permute.xlu0 0
    %68 = vperm.xlu0 %67, %v34
    %v69 = vpop.permute.xlu0 %68
    %72 = vset.pattern.permute.xlu0 0
    %73 = vperm.xlu0 %72, %v35
    %v74 = vpop.permute.xlu0 %73
    %77 = vset.pattern.permute.xlu0 0
    %78 = vperm.xlu0 %77, %v36
    %v79 = vpop.permute.xlu0 %78
    %82 = vset.pattern.permute.xlu0 0
    %83 = vperm.xlu0 %82, %v37
    %v84 = vpop.permute.xlu0 %83
    %v86 = vadd.f32 %v62, %v69
    %v87 = vadd.f32 %v63, %v74
    %v88 = vadd.f32 %v64, %v79
    %v89 = vadd.f32 %v65, %v84
    %90 = vset.pattern.permute.xlu0 1
    %91 = vperm.xlu0 %90, %v30
    %v92 = vpop.permute.xlu0 %91
    %94 = vset.pattern.permute.xlu0 1
    %95 = vperm.xlu0 %94, %v31
    %v96 = vpop.permute.xlu0 %95
    %98 = vset.pattern.permute.xlu0 1
    %99 = vperm.xlu0 %98, %v32
    %v100 = vpop.permute.xlu0 %99
    %102 = vset.pattern.permute.xlu0 1
    %103 = vperm.xlu0 %102, %v33
    %v104 = vpop.permute.xlu0 %103
    %v106 = vlaneseq
    %v107 = vshrl.u32 %v106, 7
    %v108 = vsub.s32 1, %v107
    %v109 = vrot.slane %v29, %v108
    %v110 = vmul.f32 %v92, %v109
    %v111 = vmul.f32 %v96, %v109
    %v112 = vmul.f32 %v100, %v109
    %v113 = vmul.f32 %v104, %v109
    %v114 = vadd.f32 %v86, %v110
    %v115 = vadd.f32 %v87, %v111
    %v116 = vadd.f32 %v88, %v112
    %v117 = vadd.f32 %v89, %v113
    %v118 = vtanh.pop %v114
    %v119 = vtanh.pop %v115
    %v120 = vtanh.pop %v116
    %v121 = vtanh.pop %v117
    %v122 = vld [vmem:[%s3] sm:$0xff]
    %v123 = vld [vmem:[%s3 + $0x8] sm:$0xff]
    %v124 = vld [vmem:[%s3 + $0x10] sm:$0xff]
    %v125 = vld [vmem:[%s3 + $0x18] sm:$0xff]
    %v126 = vld [vmem:[%s4] sm:$0xff]
    %v127 = vld [vmem:[%s4 + $0x8] sm:$0xff]
    %v128 = vld [vmem:[%s4 + $0x10] sm:$0xff]
    %v129 = vld [vmem:[%s4 + $0x18] sm:$0xff]
    %131 = vset.pattern.permute.xlu0 0
    %132 = vperm.xlu0 %131, %v126
    %v133 = vpop.permute.xlu0 %132
    %136 = vset.pattern.permute.xlu0 0
    %137 = vperm.xlu0 %136, %v127
    %v138 = vpop.permute.xlu0 %137
    %141 = vset.pattern.permute.xlu0 0
    %142 = vperm.xlu0 %141, %v128
    %v143 = vpop.permute.xlu0 %142
    %146 = vset.pattern.permute.xlu0 0
    %147 = vperm.xlu0 %146, %v129
    %v148 = vpop.permute.xlu0 %147
    %vm150 = vcmask 261120
    %v152 = vsel %vm150, %v122, 0
    %v155 = vsel %vm150, %v123, 0
    %v158 = vsel %vm150, %v124, 0
    %v161 = vsel %vm150, %v125, 0
    %163 = vmatprep.subr.mxu0 0.0
    %164 = vmatpush1.msra.mxu0 0.0
    %165 = vmatprep.subr.mxu0 0.0
    %166 = vmatpush1.msra.mxu0 0.0
    %167 = vmatprep.subr.mxu0 0.0
    %168 = vmatpush1.msra.mxu0 0.0
    %169 = vmatprep.subr.mxu0 0.0
    %170 = vmatpush1.msra.mxu0 0.0
    %171 = vmatprep.subr.mxu0 0.0
    %172 = vmatpush1.msra.mxu0 0.0
    %173 = vmatprep.subr.mxu0 0.0
    %174 = vmatpush1.msra.mxu0 0.0
    %175 = vmatprep.subr.mxu0 0.0
    %176 = vmatpush1.msra.mxu0 0.0
    %177 = vmatprep.subr.mxu0 0.0
    %178 = vmatpush1.msra.mxu0 0.0
    %179 = vmatprep.subr.mxu0 0.0
    %180 = vmatpush1.msra.mxu0 0.0
    %181 = vmatprep.subr.mxu0 0.0
    %182 = vmatpush1.msra.mxu0 0.0
    %183 = vmatprep.subr.mxu0 0.0
    %184 = vmatpush1.msra.mxu0 0.0
    %185 = vmatprep.subr.mxu0 0.0
    %186 = vmatpush1.msra.mxu0 0.0
    %187 = vmatprep.subr.mxu0 0.0
    %188 = vmatpush1.msra.mxu0 %v121
    %189 = vmatprep.subr.mxu0 0.0
    %190 = vmatpush1.msra.mxu0 %v120
    %191 = vmatprep.subr.mxu0 0.0
    %192 = vmatpush1.msra.mxu0 %v119
    %193 = vmatprep.subr.mxu0 0.0
    %194 = vmatpush1.msra.mxu0 %v118
    %195 = vmatprep.subr.mxu0 0.0
    %196 = vmatpush2.msra.mxu0 0.0
    %197 = vmatprep.subr.mxu0 0.0
    %198 = vmatpush2.msra.mxu0 0.0
    %199 = vmatprep.subr.mxu0 0.0
    %200 = vmatpush2.msra.mxu0 0.0
    %201 = vmatprep.subr.mxu0 0.0
    %202 = vmatpush2.msra.mxu0 0.0
    %203 = vmatprep.subr.mxu0 0.0
    %204 = vmatpush2.msra.mxu0 0.0
    %205 = vmatprep.subr.mxu0 0.0
    %206 = vmatpush2.msra.mxu0 0.0
    %207 = vmatprep.subr.mxu0 0.0
    %208 = vmatpush2.msra.mxu0 0.0
    %209 = vmatprep.subr.mxu0 0.0
    %210 = vmatpush2.msra.mxu0 0.0
    %211 = vmatprep.subr.mxu0 0.0
    %212 = vmatpush2.msra.mxu0 0.0
    %213 = vmatprep.subr.mxu0 0.0
    %214 = vmatpush2.msra.mxu0 0.0
    %215 = vmatprep.subr.mxu0 0.0
    %216 = vmatpush2.msra.mxu0 0.0
    %217 = vmatprep.subr.mxu0 0.0
    %218 = vmatpush2.msra.mxu0 0.0
    %219 = vmatprep.subr.mxu0 0.0
    %220 = vmatpush2.msra.mxu0 0.0
    %221 = vmatprep.subr.mxu0 0.0
    %222 = vmatpush2.msra.mxu0 0.0
    %223 = vmatprep.subr.mxu0 0.0
    %224 = vmatpush2.msra.mxu0 0.0
    %225 = vmatprep.subr.mxu0 0.0
    %226 = vmatpush2.msra.mxu0 0.0
    %227 = vmatprep.mubr.f32.mxu0 0.0
    %228 = vmatmul.mubr.f32.gmra.mxu0 %v152
    %v229 = vpop.f32.mrf.mxu0
    %v230 = vadd.f32 %v133, %v229
    %v231 = vpop.f32.mrf.mxu0
    %232 = vmatprep.mubr.f32.mxu0 0.0
    %233 = vmatmul.mubr.f32.gmra.mxu0 %v155
    %v234 = vpop.f32.mrf.mxu0
    %v235 = vadd.f32 %v138, %v234
    %v236 = vpop.f32.mrf.mxu0
    %237 = vmatprep.mubr.f32.mxu0 0.0
    %238 = vmatmul.mubr.f32.gmra.mxu0 %v158
    %v239 = vpop.f32.mrf.mxu0
    %v240 = vadd.f32 %v143, %v239
    %v241 = vpop.f32.mrf.mxu0
    %242 = vmatprep.mubr.f32.mxu0 0.0
    %243 = vmatmul.mubr.f32.gmra.mxu0 %v161
    %v244 = vpop.f32.mrf.mxu0
    %v245 = vadd.f32 %v148, %v244
    %v246 = vpop.f32.mrf.mxu0
    %247 = vdwg.mxu0
    %v248 = vtanh.pop %v230
    %v249 = vtanh.pop %v235
    %v250 = vtanh.pop %v240
    %v251 = vtanh.pop %v245
    %v252 = vld [vmem:[%s5] sm:$0xff]
    %v253 = vld [vmem:[%s5 + $0x8] sm:$0xff]
    %v254 = vld [vmem:[%s5 + $0x10] sm:$0xff]
    %v255 = vld [vmem:[%s5 + $0x18] sm:$0xff]
    %v256 = vld [vmem:[#allocation2] sm:$0x1]
    %258 = vset.pattern.permute.xlu0 0
    %259 = vperm.xlu0 %258, %v252
    %v260 = vpop.permute.xlu0 %259
    %263 = vset.pattern.permute.xlu0 0
    %264 = vperm.xlu0 %263, %v253
    %v265 = vpop.permute.xlu0 %264
    %268 = vset.pattern.permute.xlu0 0
    %269 = vperm.xlu0 %268, %v254
    %v270 = vpop.permute.xlu0 %269
    %273 = vset.pattern.permute.xlu0 0
    %274 = vperm.xlu0 %273, %v255
    %v275 = vpop.permute.xlu0 %274
    %v277 = vmul.f32 %v260, %v248
    %v278 = vmul.f32 %v265, %v249
    %v279 = vmul.f32 %v270, %v250
    %v280 = vmul.f32 %v275, %v251
    %v281 = vadd.f32 %v277, %v278
    %v282 = vadd.f32 %v281, %v279
    %v283 = vadd.f32 %v282, %v280
    %v284 = vrot.slane %v283, 4
    %v285 = vadd.f32 %v283, %v284
    %v286 = vrot.slane %v285, 2
    %v287 = vadd.f32 %v285, %v286
    %v288 = vrot.slane %v287, 1
    %v289 = vadd.f32 %v287, %v288
    %291 = vset.pattern.permute.xlu0 0
    %292 = vperm.xlu0 %291, %v256
    %v293 = vpop.permute.xlu0 %292
    %v295 = vlaneseq
    %v296 = vshrl.u32 %v295, 7
    %v297 = vsub.s32 0, %v296
    %v298 = vrot.slane %v293, %v297
    %v299 = vadd.f32 %v289, %v298
    %300 = vst [vmem:[#allocation3] sm:$0x1] %v299
    // Predicated region
    $region30: #{tpu_custom_call.1} parent=1 // pred_check
      _
    $region31: #{tpu_custom_call.1} parent=1 // pred_check_branch
      %302 = sbr.rel (0) target = $region33
    $region32: #{tpu_custom_call.1} parent=1 // pred_region
      %s304 = ssub.s32 16, 16
      %305 = vsyncadd [#allocation4], %s304
      %s307 = sshll.u32 [#allocation3], 4
      %s308 = int_to_ptr.vmem [resolvable:$true] %s307
      %310 = dma.vmem_to_hbm [thread:$0]  %s308, 16, %s7, [#allocation4]
    $region33: #{tpu_custom_call.1} parent=1 // pred_fallthru
      _
    // Predicated region
    $region34: #{tpu_custom_call.1} parent=1 // pred_check
      _
    $region35: #{tpu_custom_call.1} parent=1 // pred_check_branch
      %312 = sbr.rel (0) target = $region37
    $region36: #{tpu_custom_call.1} parent=1 // pred_region
      %313 = dma.done [#allocation4], 16
    $region37: #{tpu_custom_call.1} parent=1 // pred_fallthru
      _
    %314 = vsyncpa [#allocation4], 1

</llo_original>
